<compile_context>
chip_gen: v7x
topology: tpu7x:2x2x1
jax: 0.10.0
libtpu: 0.0.40
codegen_flags: <defaults>
</compile_context>

<pallas_src>
import jax
import jax.numpy as jnp
from jax.experimental import pallas as pl
from jax.experimental.pallas import tpu as pltpu

INP_DIM = 784          # layer-1 K (full-dim block, no HBM padding needed)
H1_DIM = 256
H2_DIM = 144
H2_PAD = 256           # pad hidden-2 to a full 128-multiple (exact, zero rows/cols)
Z_DIM = 32
HEAD_DIM = 2 * Z_DIM   # fused [mean | log_var]
HEAD_PAD = 128         # lane-dense output store


def _round_up(n, m):
    return ((n + m - 1) // m) * m


def _choose_tm(batch):
    """Adaptive batch tile: single 16-row-aligned tile for small B, 512 otherwise."""
    if batch <= 512:
        return _round_up(max(batch, 16), 16)
    return 512


def encoder_kernel(x_ref,
                   w1_ref, b1_ref,
                   w2_ref, b2_ref,
                   wh_ref, bh_ref,
                   out_ref):
    # x tile: [TM, 784] f32 -> bf16 for the MXU
    x = x_ref[...].astype(jnp.bfloat16)

    # layer1 + ReLU (bf16 operands, f32 accumulate)
    h1 = jnp.dot(x, w1_ref[...], preferred_element_type=jnp.float32)
    h1 = jnp.maximum(h1 + b1_ref[...], 0.0)                       # [TM, 256] f32

    # layer2 + ReLU
    h2 = jnp.dot(h1.astype(jnp.bfloat16), w2_ref[...],
                 preferred_element_type=jnp.float32)
    h2 = jnp.maximum(h2 + b2_ref[...], 0.0)                       # [TM, 256] f32

    # fused [mean | log_var | zero-pad] head -> lane-dense 128-wide store
    out = jnp.dot(h2.astype(jnp.bfloat16), wh_ref[...],
                  preferred_element_type=jnp.float32)
    out_ref[...] = out + bh_ref[...]                              # [TM, 128] f32


def pack_params(p):
    """Zero-pad + cast params to kernel layout (exact). Do this ONCE, not per call."""
    w1 = p["w1"].astype(jnp.bfloat16)                             # (784, 256)
    b1 = p["b1"].astype(jnp.float32)                              # (1, 256)

    w2 = jnp.zeros((H1_DIM, H2_PAD), jnp.bfloat16)
    w2 = w2.at[:, :H2_DIM].set(p["w2"].astype(jnp.bfloat16))      # (256, 256)
    b2 = jnp.zeros((1, H2_PAD), jnp.float32)
    b2 = b2.at[:, :H2_DIM].set(p["b2"])                           # (1, 256)

    wh_raw = jnp.concatenate([p["wm"], p["wv"]], axis=1)          # (144, 64)
    wh = jnp.zeros((H2_PAD, HEAD_PAD), jnp.bfloat16)
    wh = wh.at[:H2_DIM, :HEAD_DIM].set(wh_raw.astype(jnp.bfloat16))
    bh = jnp.zeros((1, HEAD_PAD), jnp.float32)
    bh = bh.at[:, :HEAD_DIM].set(jnp.concatenate([p["bm"], p["bv"]], axis=1))

    return w1, b1, w2, b2, wh, bh


@jax.jit
def encoder_forward(x, w1, b1, w2, b2, wh, bh):
    """x: [B, 784] f32. Pre-packed weights. Returns (mean, log_var), each [B, 32] f32."""
    B = x.shape[0]
    tm = _choose_tm(B)                    # shape-derived -> static under jit
    b_pad = pl.cdiv(B, tm) * tm

    # Only the batch dim is (cheaply) padded when needed; features untouched.
    x_k = x if b_pad == B else jnp.pad(x, ((0, b_pad - B), (0, 0)))

    grid = (b_pad // tm,)

    def resident(shape):
        # Constant index map -> block stays VMEM-resident across grid steps.
        return pl.BlockSpec(shape, lambda i: (0, 0))

    flops = 2 * b_pad * (INP_DIM * H1_DIM + H1_DIM * H2_PAD + H2_PAD * HEAD_PAD)
    bytes_accessed = (b_pad * INP_DIM * 4                            # f32 input read once
                      + (w1.size + w2.size + wh.size) * 2            # bf16 weights
                      + (b1.size + b2.size + bh.size) * 4            # f32 biases
                      + b_pad * HEAD_PAD * 4)                        # f32 output

    out = pl.pallas_call(
        encoder_kernel,
        out_shape=jax.ShapeDtypeStruct((b_pad, HEAD_PAD), jnp.float32),
        grid=grid,
        in_specs=[
            pl.BlockSpec((tm, INP_DIM), lambda i: (i, 0)),  # x tile (pipelined)
            resident((INP_DIM, H1_DIM)),
            resident((1, H1_DIM)),
            resident((H1_DIM, H2_PAD)),
            resident((1, H2_PAD)),
            resident((H2_PAD, HEAD_PAD)),
            resident((1, HEAD_PAD)),
        ],
        out_specs=pl.BlockSpec((tm, HEAD_PAD), lambda i: (i, 0)),
        compiler_params=pltpu.CompilerParams(
            dimension_semantics=("parallel",)),
        cost_estimate=pl.CostEstimate(
            flops=flops, transcendentals=0, bytes_accessed=bytes_accessed),
    )(x_k, w1, b1, w2, b2, wh, bh)

    mean = out[:B, :Z_DIM]
    log_var = out[:B, Z_DIM:HEAD_DIM]
    return mean, log_var


def init_params(key):
    """Deterministic init. Weights in (in, out) layout (transposed PyTorch)."""
    keys = jax.random.split(key, 8)

    def lin(kw, kb, fan_in, fan_out):
        bound = 1.0 / jnp.sqrt(fan_in)
        w = jax.random.uniform(kw, (fan_in, fan_out), jnp.float32, -bound, bound)
        b = jax.random.uniform(kb, (1, fan_out), jnp.float32, -bound, bound)
        return w, b

    w1, b1 = lin(keys[0], keys[1], INP_DIM, H1_DIM)
    w2, b2 = lin(keys[2], keys[3], H1_DIM, H2_DIM)
    wm, bm = lin(keys[4], keys[5], H2_DIM, Z_DIM)
    wv, bv = lin(keys[6], keys[7], H2_DIM, Z_DIM)
    return dict(w1=w1, b1=b1, w2=w2, b2=b2, wm=wm, bm=bm, wv=wv, bv=bv)


def encoder_reference(x, p):
    """Reference with the same bf16-operand / f32-accumulate precision as the kernel."""
    def bf(a):
        return a.astype(jnp.bfloat16)
    h1 = jnp.maximum(
        jnp.dot(bf(x), bf(p["w1"]), preferred_element_type=jnp.float32) + p["b1"], 0.0)
    h2 = jnp.maximum(
        jnp.dot(bf(h1), bf(p["w2"]), preferred_element_type=jnp.float32) + p["b2"], 0.0)
    mean = jnp.dot(bf(h2), bf(p["wm"]), preferred_element_type=jnp.float32) + p["bm"]
    logv = jnp.dot(bf(h2), bf(p["wv"]), preferred_element_type=jnp.float32) + p["bv"]
    return mean, logv


if __name__ == "__main__":
    key = jax.random.PRNGKey(0)
    k_params, k_x = jax.random.split(key)
    params = init_params(k_params)

    # Pack (pad + cast) weights ONCE; reuse across forward calls.
    packed = jax.tree_util.tree_map(jax.block_until_ready, pack_params(params))

    B = 8
    x = jax.random.normal(k_x, (B, INP_DIM), jnp.float32)

    mean, log_var = encoder_forward(x, *packed)
    jax.block_until_ready((mean, log_var))

    ref_mean, ref_logvar = encoder_reference(x, params)
    assert mean.shape == (B, Z_DIM) and log_var.shape == (B, Z_DIM)
    assert jnp.allclose(mean, ref_mean, atol=1e-2, rtol=1e-2), \
        float(jnp.max(jnp.abs(mean - ref_mean)))
    assert jnp.allclose(log_var, ref_logvar, atol=1e-2, rtol=1e-2), \
        float(jnp.max(jnp.abs(log_var - ref_logvar)))

    print("KERNEL_OK")
</pallas_src>

<mosaic_0001>
module attributes {stable_mosaic.version = 11 : i64} {
  func.func @encoder_kernel(%arg0: i32, %arg1: memref<16x784xf32, #tpu.memory_space<vmem>>, %arg2: memref<784x256xbf16, #tpu.memory_space<vmem>>, %arg3: memref<1x256xf32, #tpu.memory_space<vmem>>, %arg4: memref<256x256xbf16, #tpu.memory_space<vmem>>, %arg5: memref<1x256xf32, #tpu.memory_space<vmem>>, %arg6: memref<256x128xbf16, #tpu.memory_space<vmem>>, %arg7: memref<1x128xf32, #tpu.memory_space<vmem>>, %arg8: memref<16x128xf32, #tpu.memory_space<vmem>>) attributes {dimension_semantics = [#tpu.dimension_semantics<parallel>], iteration_bounds = array<i64: 1>, scalar_prefetch = 0 : i64, scratch_operands = 0 : i64, tpu.core_type = #tpu.core_type<tc>, window_params = [{transform_indices = @transform_0, window_bounds = array<i64: 16, 784>}, {pipeline_mode = #tpu.pipeline_mode<synchronous>, transform_indices = @transform_1, window_bounds = array<i64: 784, 256>}, {pipeline_mode = #tpu.pipeline_mode<synchronous>, transform_indices = @transform_2, window_bounds = array<i64: 1, 256>}, {pipeline_mode = #tpu.pipeline_mode<synchronous>, transform_indices = @transform_3, window_bounds = array<i64: 256, 256>}, {pipeline_mode = #tpu.pipeline_mode<synchronous>, transform_indices = @transform_4, window_bounds = array<i64: 1, 256>}, {pipeline_mode = #tpu.pipeline_mode<synchronous>, transform_indices = @transform_5, window_bounds = array<i64: 256, 128>}, {pipeline_mode = #tpu.pipeline_mode<synchronous>, transform_indices = @transform_6, window_bounds = array<i64: 1, 128>}, {transform_indices = @transform_7, window_bounds = array<i64: 16, 128>}]} {
    %c0 = arith.constant 0 : index
    %c0_0 = arith.constant 0 : index
    %0 = vector.load %arg1[%c0, %c0_0] : memref<16x784xf32, #tpu.memory_space<vmem>>, vector<16x784xf32>
    %1 = arith.truncf %0 : vector<16x784xf32> to vector<16x784xbf16>
    %c0_1 = arith.constant 0 : index
    %c0_2 = arith.constant 0 : index
    %2 = vector.load %arg2[%c0_1, %c0_2] : memref<784x256xbf16, #tpu.memory_space<vmem>>, vector<784x256xbf16>
    %cst = arith.constant dense<0.000000e+00> : vector<16x256xf32>
    %3 = tpu.matmul %1, %2, %cst {dimension_numbers = #tpu.dot_dimension_numbers<[1], [0], [0], [1], [0, 0, 1, 1], [], []>} : vector<16x784xbf16>, vector<784x256xbf16>, vector<16x256xf32> -> vector<16x256xf32>
    %c0_3 = arith.constant 0 : index
    %c0_4 = arith.constant 0 : index
    %4 = vector.load %arg3[%c0_3, %c0_4] : memref<1x256xf32, #tpu.memory_space<vmem>>, vector<1x256xf32>
    %5 = vector.broadcast %4 : vector<1x256xf32> to vector<16x256xf32>
    %6 = arith.addf %3, %5 : vector<16x256xf32>
    %cst_5 = arith.constant 0.000000e+00 : f32
    %7 = vector.broadcast %cst_5 : f32 to vector<16x256xf32>
    %8 = arith.maximumf %6, %7 : vector<16x256xf32>
    %9 = arith.truncf %8 : vector<16x256xf32> to vector<16x256xbf16>
    %c0_6 = arith.constant 0 : index
    %c0_7 = arith.constant 0 : index
    %10 = vector.load %arg4[%c0_6, %c0_7] : memref<256x256xbf16, #tpu.memory_space<vmem>>, vector<256x256xbf16>
    %cst_8 = arith.constant dense<0.000000e+00> : vector<16x256xf32>
    %11 = tpu.matmul %9, %10, %cst_8 {dimension_numbers = #tpu.dot_dimension_numbers<[1], [0], [0], [1], [0, 0, 1, 1], [], []>} : vector<16x256xbf16>, vector<256x256xbf16>, vector<16x256xf32> -> vector<16x256xf32>
    %c0_9 = arith.constant 0 : index
    %c0_10 = arith.constant 0 : index
    %12 = vector.load %arg5[%c0_9, %c0_10] : memref<1x256xf32, #tpu.memory_space<vmem>>, vector<1x256xf32>
    %13 = vector.broadcast %12 : vector<1x256xf32> to vector<16x256xf32>
    %14 = arith.addf %11, %13 : vector<16x256xf32>
    %cst_11 = arith.constant 0.000000e+00 : f32
    %15 = vector.broadcast %cst_11 : f32 to vector<16x256xf32>
    %16 = arith.maximumf %14, %15 : vector<16x256xf32>
    %17 = arith.truncf %16 : vector<16x256xf32> to vector<16x256xbf16>
    %c0_12 = arith.constant 0 : index
    %c0_13 = arith.constant 0 : index
    %18 = vector.load %arg6[%c0_12, %c0_13] : memref<256x128xbf16, #tpu.memory_space<vmem>>, vector<256x128xbf16>
    %cst_14 = arith.constant dense<0.000000e+00> : vector<16x128xf32>
    %19 = tpu.matmul %17, %18, %cst_14 {dimension_numbers = #tpu.dot_dimension_numbers<[1], [0], [0], [1], [0, 0, 1, 1], [], []>} : vector<16x256xbf16>, vector<256x128xbf16>, vector<16x128xf32> -> vector<16x128xf32>
    %c0_15 = arith.constant 0 : index
    %c0_16 = arith.constant 0 : index
    %20 = vector.load %arg7[%c0_15, %c0_16] : memref<1x128xf32, #tpu.memory_space<vmem>>, vector<1x128xf32>
    %21 = vector.broadcast %20 : vector<1x128xf32> to vector<16x128xf32>
    %22 = arith.addf %19, %21 : vector<16x128xf32>
    %c0_17 = arith.constant 0 : index
    %c0_18 = arith.constant 0 : index
    %23 = vector.load %arg8[%c0_17, %c0_18] : memref<16x128xf32, #tpu.memory_space<vmem>>, vector<16x128xf32>
    tpu.vector_store %arg8[%c0_17, %c0_18], %22 {strides = array<i32>} : memref<16x128xf32, #tpu.memory_space<vmem>>, vector<16x128xf32>,
    return
  }
  func.func @transform_0(%arg0: i32) -> (i32, i32) {
    %c0_i32 = arith.constant 0 : i32
    %c0_i32_0 = arith.constant 0 : i32
    return %arg0, %c0_i32 : i32, i32
  }
  func.func @transform_1(%arg0: i32) -> (i32, i32) {
    %c0_i32 = arith.constant 0 : i32
    %c0_i32_0 = arith.constant 0 : i32
    %c0_i32_1 = arith.constant 0 : i32
    return %c0_i32, %c0_i32_0 : i32, i32
  }
  func.func @transform_2(%arg0: i32) -> (i32, i32) {
    %c0_i32 = arith.constant 0 : i32
    %c0_i32_0 = arith.constant 0 : i32
    %c0_i32_1 = arith.constant 0 : i32
    return %c0_i32, %c0_i32_0 : i32, i32
  }
  func.func @transform_3(%arg0: i32) -> (i32, i32) {
    %c0_i32 = arith.constant 0 : i32
    %c0_i32_0 = arith.constant 0 : i32
    %c0_i32_1 = arith.constant 0 : i32
    return %c0_i32, %c0_i32_0 : i32, i32
  }
  func.func @transform_4(%arg0: i32) -> (i32, i32) {
    %c0_i32 = arith.constant 0 : i32
    %c0_i32_0 = arith.constant 0 : i32
    %c0_i32_1 = arith.constant 0 : i32
    return %c0_i32, %c0_i32_0 : i32, i32
  }
  func.func @transform_5(%arg0: i32) -> (i32, i32) {
    %c0_i32 = arith.constant 0 : i32
    %c0_i32_0 = arith.constant 0 : i32
    %c0_i32_1 = arith.constant 0 : i32
    return %c0_i32, %c0_i32_0 : i32, i32
  }
  func.func @transform_6(%arg0: i32) -> (i32, i32) {
    %c0_i32 = arith.constant 0 : i32
    %c0_i32_0 = arith.constant 0 : i32
    %c0_i32_1 = arith.constant 0 : i32
    return %c0_i32, %c0_i32_0 : i32, i32
  }
  func.func @transform_7(%arg0: i32) -> (i32, i32) {
    %c0_i32 = arith.constant 0 : i32
    %c0_i32_0 = arith.constant 0 : i32
    return %arg0, %c0_i32 : i32, i32
  }
}

</mosaic_0001>

<llo_original>
// kernel: encoder_forward.1
$region0: #{encoder_forward.1}
  #allocation0 [shape = 'u32[]', space=smem, size = 0x4, offset = 0x4, fixed_abs, tag = 'smem constant byte address 0x4 - core index']
  #allocation1 [shape = 'u32[144,128]{1,0:T(1,128)}', space=vmem, size = 0x12000, scoped, tag = 'internal scratch']
  %s0 = inlined_call_operand.vmem [shape: f32[16,784], index: 0, kind: input, shape index: {}]
  %s1 = inlined_call_operand.hbm [shape: bf16[784,256], index: 1, kind: input, shape index: {}]
  %s2 = inlined_call_operand.vmem [shape: f32[1,256], index: 2, kind: input, shape index: {}]
  %s3 = inlined_call_operand.hbm [shape: bf16[256,256], index: 3, kind: input, shape index: {}]
  %s4 = inlined_call_operand.vmem [shape: f32[1,256], index: 4, kind: input, shape index: {}]
  %s5 = inlined_call_operand.vmem [shape: bf16[256,128], index: 5, kind: input, shape index: {}]
  %s6 = inlined_call_operand.vmem [shape: f32[1,128], index: 6, kind: input, shape index: {}]
  %s7 = inlined_call_operand.vmem [shape: f32[16,128], index: 7, kind: output, shape index: {}]
  %s8 = sld [smem:[#allocation0]]
  $region46: #{encoder_forward.1} parent=0
    _
  %s10 = ssub.s32 1, %s8
  %s11 = scalar_select 0, %s10, %s8
  $region1: #{encoder_forward.1} parent=0
    #allocation2 [shape = 'u8[401408]{0}', space=vmem, size = 0x62000, scoped, tag = 'input window, operand 1, single buffered']
    #allocation3 [shape = 's32[1]{0}', space=sflag, size = 0x4, scoped, tag = 'scoped memory for encoder_forward.1']
    #allocation4 [shape = 'u8[131072]{0}', space=vmem, size = 0x20000, scoped, tag = 'input window, operand 3, single buffered']
    #allocation5 [shape = 's32[1]{0}', space=sflag, size = 0x4, scoped, tag = 'scoped memory for encoder_forward.1']
    %12 = vsyncpa [#allocation3], 0
    %13 = vsyncpa [#allocation5], 0
    // Predicated region
    $region2: #{encoder_forward.1} parent=1 // pred_check
      _
    $region3: #{encoder_forward.1} parent=1 // pred_check_branch
      %15 = sbr.rel (0) target = $region5
    $region4: #{encoder_forward.1} parent=1 // pred_region
      _
    $region5: #{encoder_forward.1} parent=1 // pred_fallthru
      _
    // Predicated region
    $region6: #{encoder_forward.1} parent=1 // pred_check
      _
    $region7: #{encoder_forward.1} parent=1 // pred_check_branch
      %17 = sbr.rel (0) target = $region9
    $region8: #{encoder_forward.1} parent=1 // pred_region
      %s19 = ssub.s32 12544, 12544
      %20 = vsyncadd [#allocation3], %s19
      %s21 = sshll.u32 [#allocation2], 4
      %s22 = int_to_ptr.vmem [resolvable:$true] %s21
      %27 = dma.hbm_to_vmem [thread:$0]  %s1, 12544, %s22, [#allocation3], 128, 128, 8
    $region9: #{encoder_forward.1} parent=1 // pred_fallthru
      _
    // Predicated region
    $region10: #{encoder_forward.1} parent=1 // pred_check
      _
    $region11: #{encoder_forward.1} parent=1 // pred_check_branch
      %29 = sbr.rel (0) target = $region13
    $region12: #{encoder_forward.1} parent=1 // pred_region
      _
    $region13: #{encoder_forward.1} parent=1 // pred_fallthru
      _
    // Predicated region
    $region14: #{encoder_forward.1} parent=1 // pred_check
      _
    $region15: #{encoder_forward.1} parent=1 // pred_check_branch
      %31 = sbr.rel (0) target = $region17
    $region16: #{encoder_forward.1} parent=1 // pred_region
      %s33 = ssub.s32 4096, 4096
      %34 = vsyncadd [#allocation5], %s33
      %s35 = sshll.u32 [#allocation4], 4
      %s36 = int_to_ptr.vmem [resolvable:$true] %s35
      %41 = dma.hbm_to_vmem [thread:$0]  %s3, 4096, %s36, [#allocation5], 128, 128, 8
    $region17: #{encoder_forward.1} parent=1 // pred_fallthru
      _
    // Predicated region
    $region18: #{encoder_forward.1} parent=1 // pred_check
      _
    $region19: #{encoder_forward.1} parent=1 // pred_check_branch
      %43 = sbr.rel (0) target = $region21
    $region20: #{encoder_forward.1} parent=1 // pred_region
      _
    $region21: #{encoder_forward.1} parent=1 // pred_fallthru
      _
    // Predicated region
    $region22: #{encoder_forward.1} parent=1 // pred_check
      _
    $region23: #{encoder_forward.1} parent=1 // pred_check_branch
      %45 = sbr.rel (0) target = $region25
    $region24: #{encoder_forward.1} parent=1 // pred_region
      _
    $region25: #{encoder_forward.1} parent=1 // pred_fallthru
      _
    // Predicated region
    $region26: #{encoder_forward.1} parent=1 // pred_check
      _
    $region27: #{encoder_forward.1} parent=1 // pred_check_branch
      %47 = sbr.rel (0) target = $region29
    $region28: #{encoder_forward.1} parent=1 // pred_region
      _
    $region29: #{encoder_forward.1} parent=1 // pred_fallthru
      _
    // Predicated region
    $region30: #{encoder_forward.1} parent=1 // pred_check
      _
    $region31: #{encoder_forward.1} parent=1 // pred_check_branch
      %49 = sbr.rel (0) target = $region33
    $region32: #{encoder_forward.1} parent=1 // pred_region
      %50 = dma.done [#allocation3], 12544
    $region33: #{encoder_forward.1} parent=1 // pred_fallthru
      _
    // Predicated region
    $region34: #{encoder_forward.1} parent=1 // pred_check
      _
    $region35: #{encoder_forward.1} parent=1 // pred_check_branch
      %52 = sbr.rel (0) target = $region37
    $region36: #{encoder_forward.1} parent=1 // pred_region
      %53 = dma.done [#allocation5], 4096
    $region37: #{encoder_forward.1} parent=1 // pred_fallthru
      _
    %v55 = vld [vmem:[%s0] sm:$0xff]
    %v56 = vld [vmem:[%s0 + $0x8] sm:$0xff]
    %v57 = vld [vmem:[%s0 + $0x10] sm:$0xff]
    %v58 = vld [vmem:[%s0 + $0x18] sm:$0xff]
    %v59 = vld [vmem:[%s0 + $0x20] sm:$0xff]
    %v60 = vld [vmem:[%s0 + $0x28] sm:$0xff]
    %v61 = vld [vmem:[%s0 + $0x30] sm:$0xff]
    %v62 = vld [vmem:[%s0 + $0x38] sm:$0xff]
    %v63 = vld [vmem:[%s0 + $0x40] sm:$0xff]
    %v64 = vld [vmem:[%s0 + $0x48] sm:$0xff]
    %v65 = vld [vmem:[%s0 + $0x50] sm:$0xff]
    %v66 = vld [vmem:[%s0 + $0x58] sm:$0xff]
    %v67 = vld [vmem:[%s0 + $0x60] sm:$0xff]
    %v68 = vld [vmem:[%s0 + $0x68] sm:$0xff]
    %v69 = vpack.c.bf16 %v62, %v55
    %v70 = vpack.c.bf16 %v63, %v56
    %v71 = vpack.c.bf16 %v64, %v57
    %v72 = vpack.c.bf16 %v65, %v58
    %v73 = vpack.c.bf16 %v66, %v59
    %v74 = vpack.c.bf16 %v67, %v60
    %v75 = vpack.c.bf16 %v68, %v61
    %v76 = vld [vmem:[#allocation2] sm:$0xff]
    %v77 = vld [vmem:[#allocation2 + $0x8] sm:$0xff]
    %v78 = vld [vmem:[#allocation2 + $0x10] sm:$0xff]
    %v79 = vld [vmem:[#allocation2 + $0x18] sm:$0xff]
    %v80 = vld [vmem:[#allocation2 + $0x20] sm:$0xff]
    %v81 = vld [vmem:[#allocation2 + $0x28] sm:$0xff]
    %v82 = vld [vmem:[#allocation2 + $0x30] sm:$0xff]
    %v83 = vld [vmem:[#allocation2 + $0x38] sm:$0xff]
    %v84 = vld [vmem:[#allocation2 + $0x40] sm:$0xff]
    %v85 = vld [vmem:[#allocation2 + $0x48] sm:$0xff]
    %v86 = vld [vmem:[#allocation2 + $0x50] sm:$0xff]
    %v87 = vld [vmem:[#allocation2 + $0x58] sm:$0xff]
    %v88 = vld [vmem:[#allocation2 + $0x60] sm:$0xff]
    %v89 = vld [vmem:[#allocation2 + $0x68] sm:$0xff]
    %v90 = vld [vmem:[#allocation2 + $0x70] sm:$0xff]
    %v91 = vld [vmem:[#allocation2 + $0x78] sm:$0xff]
    %v92 = vld [vmem:[#allocation2 + $0x80] sm:$0xff]
    %v93 = vld [vmem:[#allocation2 + $0x88] sm:$0xff]
    %v94 = vld [vmem:[#allocation2 + $0x90] sm:$0xff]
    %v95 = vld [vmem:[#allocation2 + $0x98] sm:$0xff]
    %v96 = vld [vmem:[#allocation2 + $0xa0] sm:$0xff]
    %v97 = vld [vmem:[#allocation2 + $0xa8] sm:$0xff]
    %v98 = vld [vmem:[#allocation2 + $0xb0] sm:$0xff]
    %v99 = vld [vmem:[#allocation2 + $0xb8] sm:$0xff]
    %v100 = vld [vmem:[#allocation2 + $0xc0] sm:$0xff]
    %v101 = vld [vmem:[#allocation2 + $0xc8] sm:$0xff]
    %v102 = vld [vmem:[#allocation2 + $0xd0] sm:$0xff]
    %v103 = vld [vmem:[#allocation2 + $0xd8] sm:$0xff]
    %v104 = vld [vmem:[#allocation2 + $0xe0] sm:$0xff]
    %v105 = vld [vmem:[#allocation2 + $0xe8] sm:$0xff]
    %v106 = vld [vmem:[#allocation2 + $0xf0] sm:$0xff]
    %v107 = vld [vmem:[#allocation2 + $0xf8] sm:$0xff]
    %v108 = vld [vmem:[#allocation2 + $0x100] sm:$0xff]
    %v109 = vld [vmem:[#allocation2 + $0x108] sm:$0xff]
    %v110 = vld [vmem:[#allocation2 + $0x110] sm:$0xff]
    %v111 = vld [vmem:[#allocation2 + $0x118] sm:$0xff]
    %v112 = vld [vmem:[#allocation2 + $0x120] sm:$0xff]
    %v113 = vld [vmem:[#allocation2 + $0x128] sm:$0xff]
    %v114 = vld [vmem:[#allocation2 + $0x130] sm:$0xff]
    %v115 = vld [vmem:[#allocation2 + $0x138] sm:$0xff]
    %v116 = vld [vmem:[#allocation2 + $0x140] sm:$0xff]
    %v117 = vld [vmem:[#allocation2 + $0x148] sm:$0xff]
    %v118 = vld [vmem:[#allocation2 + $0x150] sm:$0xff]
    %v119 = vld [vmem:[#allocation2 + $0x158] sm:$0xff]
    %v120 = vld [vmem:[#allocation2 + $0x160] sm:$0xff]
    %v121 = vld [vmem:[#allocation2 + $0x168] sm:$0xff]
    %v122 = vld [vmem:[#allocation2 + $0x170] sm:$0xff]
    %v123 = vld [vmem:[#allocation2 + $0x178] sm:$0xff]
    %v124 = vld [vmem:[#allocation2 + $0x180] sm:$0xff]
    %v125 = vld [vmem:[#allocation2 + $0x188] sm:$0xff]
    %v126 = vld [vmem:[#allocation2 + $0x190] sm:$0xff]
    %v127 = vld [vmem:[#allocation2 + $0x198] sm:$0xff]
    %v128 = vld [vmem:[#allocation2 + $0x1a0] sm:$0xff]
    %v129 = vld [vmem:[#allocation2 + $0x1a8] sm:$0xff]
    %v130 = vld [vmem:[#allocation2 + $0x1b0] sm:$0xff]
    %v131 = vld [vmem:[#allocation2 + $0x1b8] sm:$0xff]
    %v132 = vld [vmem:[#allocation2 + $0x1c0] sm:$0xff]
    %v133 = vld [vmem:[#allocation2 + $0x1c8] sm:$0xff]
    %v134 = vld [vmem:[#allocation2 + $0x1d0] sm:$0xff]
    %v135 = vld [vmem:[#allocation2 + $0x1d8] sm:$0xff]
    %v136 = vld [vmem:[#allocation2 + $0x1e0] sm:$0xff]
    %v137 = vld [vmem:[#allocation2 + $0x1e8] sm:$0xff]
    %v138 = vld [vmem:[#allocation2 + $0x1f0] sm:$0xff]
    %v139 = vld [vmem:[#allocation2 + $0x1f8] sm:$0xff]
    %v140 = vld [vmem:[#allocation2 + $0x200] sm:$0xff]
    %v141 = vld [vmem:[#allocation2 + $0x208] sm:$0xff]
    %v142 = vld [vmem:[#allocation2 + $0x210] sm:$0xff]
    %v143 = vld [vmem:[#allocation2 + $0x218] sm:$0xff]
    %v144 = vld [vmem:[#allocation2 + $0x220] sm:$0xff]
    %v145 = vld [vmem:[#allocation2 + $0x228] sm:$0xff]
    %v146 = vld [vmem:[#allocation2 + $0x230] sm:$0xff]
    %v147 = vld [vmem:[#allocation2 + $0x238] sm:$0xff]
    %v148 = vld [vmem:[#allocation2 + $0x240] sm:$0xff]
    %v149 = vld [vmem:[#allocation2 + $0x248] sm:$0xff]
    %v150 = vld [vmem:[#allocation2 + $0x250] sm:$0xff]
    %v151 = vld [vmem:[#allocation2 + $0x258] sm:$0xff]
    %v152 = vld [vmem:[#allocation2 + $0x260] sm:$0xff]
    %v153 = vld [vmem:[#allocation2 + $0x268] sm:$0xff]
    %v154 = vld [vmem:[#allocation2 + $0x270] sm:$0xff]
    %v155 = vld [vmem:[#allocation2 + $0x278] sm:$0xff]
    %v156 = vld [vmem:[#allocation2 + $0x280] sm:$0xff]
    %v157 = vld [vmem:[#allocation2 + $0x288] sm:$0xff]
    %v158 = vld [vmem:[#allocation2 + $0x290] sm:$0xff]
    %v159 = vld [vmem:[#allocation2 + $0x298] sm:$0xff]
    %v160 = vld [vmem:[#allocation2 + $0x2a0] sm:$0xff]
    %v161 = vld [vmem:[#allocation2 + $0x2a8] sm:$0xff]
    %v162 = vld [vmem:[#allocation2 + $0x2b0] sm:$0xff]
    %v163 = vld [vmem:[#allocation2 + $0x2b8] sm:$0xff]
    %v164 = vld [vmem:[#allocation2 + $0x2c0] sm:$0xff]
    %v165 = vld [vmem:[#allocation2 + $0x2c8] sm:$0xff]
    %v166 = vld [vmem:[#allocation2 + $0x2d0] sm:$0xff]
    %v167 = vld [vmem:[#allocation2 + $0x2d8] sm:$0xff]
    %v168 = vld [vmem:[#allocation2 + $0x2e0] sm:$0xff]
    %v169 = vld [vmem:[#allocation2 + $0x2e8] sm:$0xff]
    %v170 = vld [vmem:[#allocation2 + $0x2f0] sm:$0xff]
    %v171 = vld [vmem:[#allocation2 + $0x2f8] sm:$0xff]
    %v172 = vld [vmem:[#allocation2 + $0x300] sm:$0xff]
    %v173 = vld [vmem:[#allocation2 + $0x308] sm:$0xff]
    %v174 = vld [vmem:[%s2] sm:$0x3]
    %v176 = vlaneseq
    %v177 = vshrl.u32 %v176, 7
    %v178 = vsub.s32 0, %v177
    %v179 = vrot.slane %v174, %v178
    %v180 = vlaneseq
    %v181 = vshrl.u32 %v180, 7
    %v182 = vsub.s32 1, %v181
    %v183 = vrot.slane %v174, %v182
    %v284 = vunpack.c.l.b16 %v76
    %v285 = vunpack.c.h.b16 %v76
    %v286 = vunpack.c.l.b16 %v77
    %v287 = vunpack.c.h.b16 %v77
    %v288 = vunpack.c.l.b16 %v78
    %v289 = vunpack.c.h.b16 %v78
    %v290 = vunpack.c.l.b16 %v79
    %v291 = vunpack.c.h.b16 %v79
    %v292 = vunpack.c.l.b16 %v80
    %v293 = vunpack.c.h.b16 %v80
    %v294 = vunpack.c.l.b16 %v81
    %v295 = vunpack.c.h.b16 %v81
    %v296 = vunpack.c.l.b16 %v82
    %v297 = vunpack.c.h.b16 %v82
    %v298 = vunpack.c.l.b16 %v83
    %v299 = vunpack.c.h.b16 %v83
    %v300 = vunpack.c.l.b16 %v84
    %v301 = vunpack.c.h.b16 %v84
    %v302 = vunpack.c.l.b16 %v85
    %v303 = vunpack.c.h.b16 %v85
    %v304 = vunpack.c.l.b16 %v86
    %v305 = vunpack.c.h.b16 %v86
    %v306 = vunpack.c.l.b16 %v87
    %v307 = vunpack.c.h.b16 %v87
    %v308 = vunpack.c.l.b16 %v88
    %v309 = vunpack.c.h.b16 %v88
    %v310 = vunpack.c.l.b16 %v89
    %v311 = vunpack.c.h.b16 %v89
    %v312 = vunpack.c.l.b16 %v90
    %v313 = vunpack.c.h.b16 %v90
    %v314 = vunpack.c.l.b16 %v91
    %v315 = vunpack.c.h.b16 %v91
    %v316 = vunpack.c.l.b16 %v92
    %v317 = vunpack.c.h.b16 %v92
    %v318 = vunpack.c.l.b16 %v93
    %v319 = vunpack.c.h.b16 %v93
    %v320 = vunpack.c.l.b16 %v94
    %v321 = vunpack.c.h.b16 %v94
    %v322 = vunpack.c.l.b16 %v95
    %v323 = vunpack.c.h.b16 %v95
    %v324 = vunpack.c.l.b16 %v96
    %v325 = vunpack.c.h.b16 %v96
    %v326 = vunpack.c.l.b16 %v97
    %v327 = vunpack.c.h.b16 %v97
    %v328 = vunpack.c.l.b16 %v98
    %v329 = vunpack.c.h.b16 %v98
    %v330 = vunpack.c.l.b16 %v99
    %v331 = vunpack.c.h.b16 %v99
    %v332 = vunpack.c.l.b16 %v100
    %v333 = vunpack.c.h.b16 %v100
    %v334 = vunpack.c.l.b16 %v101
    %v335 = vunpack.c.h.b16 %v101
    %v336 = vunpack.c.l.b16 %v102
    %v337 = vunpack.c.h.b16 %v102
    %v338 = vunpack.c.l.b16 %v103
    %v339 = vunpack.c.h.b16 %v103
    %v340 = vunpack.c.l.b16 %v104
    %v341 = vunpack.c.h.b16 %v104
    %v342 = vunpack.c.l.b16 %v105
    %v343 = vunpack.c.h.b16 %v105
    %v344 = vunpack.c.l.b16 %v106
    %v345 = vunpack.c.h.b16 %v106
    %v346 = vunpack.c.l.b16 %v107
    %v347 = vunpack.c.h.b16 %v107
    %v348 = vunpack.c.l.b16 %v108
    %v349 = vunpack.c.h.b16 %v108
    %v350 = vunpack.c.l.b16 %v109
    %v351 = vunpack.c.h.b16 %v109
    %v352 = vunpack.c.l.b16 %v110
    %v353 = vunpack.c.h.b16 %v110
    %v354 = vunpack.c.l.b16 %v111
    %v355 = vunpack.c.h.b16 %v111
    %v356 = vunpack.c.l.b16 %v112
    %v357 = vunpack.c.h.b16 %v112
    %v358 = vunpack.c.l.b16 %v113
    %v359 = vunpack.c.h.b16 %v113
    %v360 = vunpack.c.l.b16 %v114
    %v361 = vunpack.c.h.b16 %v114
    %v362 = vunpack.c.l.b16 %v115
    %v363 = vunpack.c.h.b16 %v115
    %v364 = vunpack.c.l.b16 %v116
    %v365 = vunpack.c.h.b16 %v116
    %v366 = vunpack.c.l.b16 %v117
    %v367 = vunpack.c.h.b16 %v117
    %v368 = vunpack.c.l.b16 %v118
    %v369 = vunpack.c.h.b16 %v118
    %v370 = vunpack.c.l.b16 %v119
    %v371 = vunpack.c.h.b16 %v119
    %v372 = vunpack.c.l.b16 %v120
    %v373 = vunpack.c.h.b16 %v120
    %v374 = vunpack.c.l.b16 %v121
    %v375 = vunpack.c.h.b16 %v121
    %v376 = vunpack.c.l.b16 %v122
    %v377 = vunpack.c.h.b16 %v122
    %v378 = vunpack.c.l.b16 %v123
    %v379 = vunpack.c.h.b16 %v123
    %v380 = vunpack.c.l.b16 %v124
    %v381 = vunpack.c.h.b16 %v124
    %v382 = vunpack.c.l.b16 %v125
    %v383 = vunpack.c.h.b16 %v125
    %v384 = vunpack.c.l.b16 %v126
    %v385 = vunpack.c.h.b16 %v126
    %v386 = vunpack.c.l.b16 %v127
    %v387 = vunpack.c.h.b16 %v127
    %v388 = vunpack.c.l.b16 %v128
    %v389 = vunpack.c.h.b16 %v128
    %v390 = vunpack.c.l.b16 %v129
    %v391 = vunpack.c.h.b16 %v129
    %v392 = vunpack.c.l.b16 %v130
    %v393 = vunpack.c.h.b16 %v130
    %v394 = vunpack.c.l.b16 %v131
    %v395 = vunpack.c.h.b16 %v131
    %v396 = vunpack.c.l.b16 %v132
    %v397 = vunpack.c.h.b16 %v132
    %v398 = vunpack.c.l.b16 %v133
    %v399 = vunpack.c.h.b16 %v133
    %v400 = vunpack.c.l.b16 %v134
    %v401 = vunpack.c.h.b16 %v134
    %v402 = vunpack.c.l.b16 %v135
    %v403 = vunpack.c.h.b16 %v135
    %v404 = vunpack.c.l.b16 %v136
    %v405 = vunpack.c.h.b16 %v136
    %v406 = vunpack.c.l.b16 %v137
    %v407 = vunpack.c.h.b16 %v137
    %v408 = vunpack.c.l.b16 %v138
    %v409 = vunpack.c.h.b16 %v138
    %v410 = vunpack.c.l.b16 %v139
    %v411 = vunpack.c.h.b16 %v139
    %v412 = vunpack.c.l.b16 %v140
    %v413 = vunpack.c.h.b16 %v140
    %v414 = vunpack.c.l.b16 %v141
    %v415 = vunpack.c.h.b16 %v141
    %v416 = vunpack.c.l.b16 %v142
    %v417 = vunpack.c.h.b16 %v142
    %v418 = vunpack.c.l.b16 %v143
    %v419 = vunpack.c.h.b16 %v143
    %v420 = vunpack.c.l.b16 %v144
    %v421 = vunpack.c.h.b16 %v144
    %v422 = vunpack.c.l.b16 %v145
    %v423 = vunpack.c.h.b16 %v145
    %v424 = vunpack.c.l.b16 %v146
    %v425 = vunpack.c.h.b16 %v146
    %v426 = vunpack.c.l.b16 %v147
    %v427 = vunpack.c.h.b16 %v147
    %v428 = vunpack.c.l.b16 %v148
    %v429 = vunpack.c.h.b16 %v148
    %v430 = vunpack.c.l.b16 %v149
    %v431 = vunpack.c.h.b16 %v149
    %v432 = vunpack.c.l.b16 %v150
    %v433 = vunpack.c.h.b16 %v150
    %v434 = vunpack.c.l.b16 %v151
    %v435 = vunpack.c.h.b16 %v151
    %v436 = vunpack.c.l.b16 %v152
    %v437 = vunpack.c.h.b16 %v152
    %v438 = vunpack.c.l.b16 %v153
    %v439 = vunpack.c.h.b16 %v153
    %v440 = vunpack.c.l.b16 %v154
    %v441 = vunpack.c.h.b16 %v154
    %v442 = vunpack.c.l.b16 %v155
    %v443 = vunpack.c.h.b16 %v155
    %v444 = vunpack.c.l.b16 %v156
    %v445 = vunpack.c.h.b16 %v156
    %v446 = vunpack.c.l.b16 %v157
    %v447 = vunpack.c.h.b16 %v157
    %v448 = vunpack.c.l.b16 %v158
    %v449 = vunpack.c.h.b16 %v158
    %v450 = vunpack.c.l.b16 %v159
    %v451 = vunpack.c.h.b16 %v159
    %v452 = vunpack.c.l.b16 %v160
    %v453 = vunpack.c.h.b16 %v160
    %v454 = vunpack.c.l.b16 %v161
    %v455 = vunpack.c.h.b16 %v161
    %v456 = vunpack.c.l.b16 %v162
    %v457 = vunpack.c.h.b16 %v162
    %v458 = vunpack.c.l.b16 %v163
    %v459 = vunpack.c.h.b16 %v163
    %v460 = vunpack.c.l.b16 %v164
    %v461 = vunpack.c.h.b16 %v164
    %v462 = vunpack.c.l.b16 %v165
    %v463 = vunpack.c.h.b16 %v165
    %v464 = vunpack.c.l.b16 %v166
    %v465 = vunpack.c.h.b16 %v166
    %v466 = vunpack.c.l.b16 %v167
    %v467 = vunpack.c.h.b16 %v167
    %v468 = vunpack.c.l.b16 %v168
    %v469 = vunpack.c.h.b16 %v168
    %v470 = vunpack.c.l.b16 %v169
    %v471 = vunpack.c.h.b16 %v169
    %v472 = vunpack.c.l.b16 %v170
    %v473 = vunpack.c.h.b16 %v170
    %v474 = vunpack.c.l.b16 %v171
    %v475 = vunpack.c.h.b16 %v171
    %v476 = vunpack.c.l.b16 %v172
    %v477 = vunpack.c.h.b16 %v172
    %v478 = vunpack.c.l.b16 %v173
    %v479 = vunpack.c.h.b16 %v173
    %v480 = vpack.c.b16 %v286, %v284
    %v481 = vpack.c.b16 %v287, %v285
    %v482 = vpack.c.b16 %v290, %v288
    %v483 = vpack.c.b16 %v291, %v289
    %v484 = vpack.c.b16 %v294, %v292
    %v485 = vpack.c.b16 %v295, %v293
    %v486 = vpack.c.b16 %v298, %v296
    %v487 = vpack.c.b16 %v299, %v297
    %v488 = vpack.c.b16 %v302, %v300
    %v489 = vpack.c.b16 %v303, %v301
    %v490 = vpack.c.b16 %v306, %v304
    %v491 = vpack.c.b16 %v307, %v305
    %v492 = vpack.c.b16 %v310, %v308
    %v493 = vpack.c.b16 %v311, %v309
    %v494 = vpack.c.b16 %v314, %v312
    %v495 = vpack.c.b16 %v315, %v313
    %v496 = vpack.c.b16 %v318, %v316
    %v497 = vpack.c.b16 %v319, %v317
    %v498 = vpack.c.b16 %v322, %v320
    %v499 = vpack.c.b16 %v323, %v321
    %v500 = vpack.c.b16 %v326, %v324
    %v501 = vpack.c.b16 %v327, %v325
    %v502 = vpack.c.b16 %v330, %v328
    %v503 = vpack.c.b16 %v331, %v329
    %v504 = vpack.c.b16 %v334, %v332
    %v505 = vpack.c.b16 %v335, %v333
    %v506 = vpack.c.b16 %v338, %v336
    %v507 = vpack.c.b16 %v339, %v337
    %v508 = vpack.c.b16 %v342, %v340
    %v509 = vpack.c.b16 %v343, %v341
    %v510 = vpack.c.b16 %v346, %v344
    %v511 = vpack.c.b16 %v347, %v345
    %v512 = vpack.c.b16 %v350, %v348
    %v513 = vpack.c.b16 %v351, %v349
    %v514 = vpack.c.b16 %v354, %v352
    %v515 = vpack.c.b16 %v355, %v353
    %v516 = vpack.c.b16 %v358, %v356
    %v517 = vpack.c.b16 %v359, %v357
    %v518 = vpack.c.b16 %v362, %v360
    %v519 = vpack.c.b16 %v363, %v361
    %v520 = vpack.c.b16 %v366, %v364
    %v521 = vpack.c.b16 %v367, %v365
    %v522 = vpack.c.b16 %v370, %v368
    %v523 = vpack.c.b16 %v371, %v369
    %v524 = vpack.c.b16 %v374, %v372
    %v525 = vpack.c.b16 %v375, %v373
    %v526 = vpack.c.b16 %v378, %v376
    %v527 = vpack.c.b16 %v379, %v377
    %v528 = vpack.c.b16 %v382, %v380
    %v529 = vpack.c.b16 %v383, %v381
    %v530 = vpack.c.b16 %v386, %v384
    %v531 = vpack.c.b16 %v387, %v385
    %v532 = vpack.c.b16 %v390, %v388
    %v533 = vpack.c.b16 %v391, %v389
    %v534 = vpack.c.b16 %v394, %v392
    %v535 = vpack.c.b16 %v395, %v393
    %v536 = vpack.c.b16 %v398, %v396
    %v537 = vpack.c.b16 %v399, %v397
    %v538 = vpack.c.b16 %v402, %v400
    %v539 = vpack.c.b16 %v403, %v401
    %v540 = vpack.c.b16 %v406, %v404
    %v541 = vpack.c.b16 %v407, %v405
    %v542 = vpack.c.b16 %v410, %v408
    %v543 = vpack.c.b16 %v411, %v409
    %v544 = vpack.c.b16 %v414, %v412
    %v545 = vpack.c.b16 %v415, %v413
    %v546 = vpack.c.b16 %v418, %v416
    %v547 = vpack.c.b16 %v419, %v417
    %v548 = vpack.c.b16 %v422, %v420
    %v549 = vpack.c.b16 %v423, %v421
    %v550 = vpack.c.b16 %v426, %v424
    %v551 = vpack.c.b16 %v427, %v425
    %v552 = vpack.c.b16 %v430, %v428
    %v553 = vpack.c.b16 %v431, %v429
    %v554 = vpack.c.b16 %v434, %v432
    %v555 = vpack.c.b16 %v435, %v433
    %v556 = vpack.c.b16 %v438, %v436
    %v557 = vpack.c.b16 %v439, %v437
    %v558 = vpack.c.b16 %v442, %v440
    %v559 = vpack.c.b16 %v443, %v441
    %v560 = vpack.c.b16 %v446, %v444
    %v561 = vpack.c.b16 %v447, %v445
    %v562 = vpack.c.b16 %v450, %v448
    %v563 = vpack.c.b16 %v451, %v449
    %v564 = vpack.c.b16 %v454, %v452
    %v565 = vpack.c.b16 %v455, %v453
    %v566 = vpack.c.b16 %v458, %v456
    %v567 = vpack.c.b16 %v459, %v457
    %v568 = vpack.c.b16 %v462, %v460
    %v569 = vpack.c.b16 %v463, %v461
    %v570 = vpack.c.b16 %v466, %v464
    %v571 = vpack.c.b16 %v467, %v465
    %v572 = vpack.c.b16 %v470, %v468
    %v573 = vpack.c.b16 %v471, %v469
    %v574 = vpack.c.b16 %v474, %v472
    %v575 = vpack.c.b16 %v475, %v473
    %v576 = vpack.c.b16 %v478, %v476
    %v577 = vpack.c.b16 %v479, %v477
    %vm676 = vcmask 130048
    %v678 = vsel %vm676, %v75, 0
    %680 = vmatprep.subr.bf16.mxu0 %v481
    %681 = vmatpush1.bf16.msra.mxu0 %v480
    %682 = vmatprep.subr.bf16.mxu0 %v483
    %683 = vmatpush1.bf16.msra.mxu0 %v482
    %684 = vmatprep.subr.bf16.mxu0 %v485
    %685 = vmatpush1.bf16.msra.mxu0 %v484
    %686 = vmatprep.subr.bf16.mxu0 %v487
    %687 = vmatpush1.bf16.msra.mxu0 %v486
    %688 = vmatprep.subr.bf16.mxu0 %v489
    %689 = vmatpush1.bf16.msra.mxu0 %v488
    %690 = vmatprep.subr.bf16.mxu0 %v491
    %691 = vmatpush1.bf16.msra.mxu0 %v490
    %692 = vmatprep.subr.bf16.mxu0 %v493
    %693 = vmatpush1.bf16.msra.mxu0 %v492
    %694 = vmatprep.subr.bf16.mxu0 %v495
    %695 = vmatpush1.bf16.msra.mxu0 %v494
    %696 = vmatprep.subr.bf16.mxu0 %v497
    %697 = vmatpush1.bf16.msra.mxu0 %v496
    %698 = vmatprep.subr.bf16.mxu0 %v499
    %699 = vmatpush1.bf16.msra.mxu0 %v498
    %700 = vmatprep.subr.bf16.mxu0 %v501
    %701 = vmatpush1.bf16.msra.mxu0 %v500
    %702 = vmatprep.subr.bf16.mxu0 %v503
    %703 = vmatpush1.bf16.msra.mxu0 %v502
    %704 = vmatprep.subr.bf16.mxu0 %v505
    %705 = vmatpush1.bf16.msra.mxu0 %v504
    %706 = vmatprep.subr.bf16.mxu0 %v507
    %707 = vmatpush1.bf16.msra.mxu0 %v506
    %708 = vmatprep.subr.bf16.mxu0 %v509
    %709 = vmatpush1.bf16.msra.mxu0 %v508
    %710 = vmatprep.subr.bf16.mxu0 %v511
    %711 = vmatpush1.bf16.msra.mxu0 %v510
    %712 = vmatprep.mubr.bf16.mxu0 %v70
    %713 = vmatmul.mubr.bf16.gmra.mrb[0].mxu0 %v69
    %v714 = vpop.f32.mrb[0].mxu0
    %v715 = vadd.f32 %v179, %v714
    %v716 = vpop.f32.mrb[0].mxu0
    %v717 = vadd.f32 %v183, %v716
    %v718 = vpop.f32.mrb[0].mxu0
    %v719 = vadd.f32 %v179, %v718
    %v720 = vpop.f32.mrb[0].mxu0
    %v721 = vadd.f32 %v183, %v720
    %722 = vdwg.mxu0
    %723 = vmatprep.subr.bf16.mxu0 %v513
    %724 = vmatpush1.bf16.msra.mxu0 %v512
    %725 = vmatprep.subr.bf16.mxu0 %v515
    %726 = vmatpush1.bf16.msra.mxu0 %v514
    %727 = vmatprep.subr.bf16.mxu0 %v517
    %728 = vmatpush1.bf16.msra.mxu0 %v516
    %729 = vmatprep.subr.bf16.mxu0 %v519
    %730 = vmatpush1.bf16.msra.mxu0 %v518
    %731 = vmatprep.subr.bf16.mxu0 %v521
    %732 = vmatpush1.bf16.msra.mxu0 %v520
    %733 = vmatprep.subr.bf16.mxu0 %v523
    %734 = vmatpush1.bf16.msra.mxu0 %v522
    %735 = vmatprep.subr.bf16.mxu0 %v525
    %736 = vmatpush1.bf16.msra.mxu0 %v524
    %737 = vmatprep.subr.bf16.mxu0 %v527
    %738 = vmatpush1.bf16.msra.mxu0 %v526
    %739 = vmatprep.subr.bf16.mxu0 %v529
    %740 = vmatpush1.bf16.msra.mxu0 %v528
    %741 = vmatprep.subr.bf16.mxu0 %v531
    %742 = vmatpush1.bf16.msra.mxu0 %v530
    %743 = vmatprep.subr.bf16.mxu0 %v533
    %744 = vmatpush1.bf16.msra.mxu0 %v532
    %745 = vmatprep.subr.bf16.mxu0 %v535
    %746 = vmatpush1.bf16.msra.mxu0 %v534
    %747 = vmatprep.subr.bf16.mxu0 %v537
    %748 = vmatpush1.bf16.msra.mxu0 %v536
    %749 = vmatprep.subr.bf16.mxu0 %v539
    %750 = vmatpush1.bf16.msra.mxu0 %v538
    %751 = vmatprep.subr.bf16.mxu0 %v541
    %752 = vmatpush1.bf16.msra.mxu0 %v540
    %753 = vmatprep.subr.bf16.mxu0 %v543
    %754 = vmatpush1.bf16.msra.mxu0 %v542
    %755 = vmatprep.mubr.bf16.mxu0 %v72
    %756 = vmatmul.mubr.bf16.gmra.mrb[0].mxu0 %v71
    %v757 = vpop.f32.mrb[0].mxu0
    %v758 = vadd.f32 %v715, %v757
    %v759 = vpop.f32.mrb[0].mxu0
    %v760 = vadd.f32 %v717, %v759
    %v761 = vpop.f32.mrb[0].mxu0
    %v762 = vadd.f32 %v719, %v761
    %v763 = vpop.f32.mrb[0].mxu0
    %v764 = vadd.f32 %v721, %v763
    %765 = vdwg.mxu0
    %766 = vmatprep.subr.bf16.mxu0 %v545
    %767 = vmatpush1.bf16.msra.mxu0 %v544
    %768 = vmatprep.subr.bf16.mxu0 %v547
    %769 = vmatpush1.bf16.msra.mxu0 %v546
    %770 = vmatprep.subr.bf16.mxu0 %v549
    %771 = vmatpush1.bf16.msra.mxu0 %v548
    %772 = vmatprep.subr.bf16.mxu0 %v551
    %773 = vmatpush1.bf16.msra.mxu0 %v550
    %774 = vmatprep.subr.bf16.mxu0 %v553
    %775 = vmatpush1.bf16.msra.mxu0 %v552
    %776 = vmatprep.subr.bf16.mxu0 %v555
    %777 = vmatpush1.bf16.msra.mxu0 %v554
    %778 = vmatprep.subr.bf16.mxu0 %v557
    %779 = vmatpush1.bf16.msra.mxu0 %v556
    %780 = vmatprep.subr.bf16.mxu0 %v559
    %781 = vmatpush1.bf16.msra.mxu0 %v558
    %782 = vmatprep.subr.bf16.mxu0 %v561
    %783 = vmatpush1.bf16.msra.mxu0 %v560
    %784 = vmatprep.subr.bf16.mxu0 %v563
    %785 = vmatpush1.bf16.msra.mxu0 %v562
    %786 = vmatprep.subr.bf16.mxu0 %v565
    %787 = vmatpush1.bf16.msra.mxu0 %v564
    %788 = vmatprep.subr.bf16.mxu0 %v567
    %789 = vmatpush1.bf16.msra.mxu0 %v566
    %790 = vmatprep.subr.bf16.mxu0 %v569
    %791 = vmatpush1.bf16.msra.mxu0 %v568
    %792 = vmatprep.subr.bf16.mxu0 %v571
    %793 = vmatpush1.bf16.msra.mxu0 %v570
    %794 = vmatprep.subr.bf16.mxu0 %v573
    %795 = vmatpush1.bf16.msra.mxu0 %v572
    %796 = vmatprep.subr.bf16.mxu0 %v575
    %797 = vmatpush1.bf16.msra.mxu0 %v574
    %798 = vmatprep.mubr.bf16.mxu0 %v74
    %799 = vmatmul.mubr.bf16.gmra.mrb[0].mxu0 %v73
    %v800 = vpop.f32.mrb[0].mxu0
    %v801 = vadd.f32 %v758, %v800
    %v802 = vpop.f32.mrb[0].mxu0
    %v803 = vadd.f32 %v760, %v802
    %v804 = vpop.f32.mrb[0].mxu0
    %v805 = vadd.f32 %v762, %v804
    %v806 = vpop.f32.mrb[0].mxu0
    %v807 = vadd.f32 %v764, %v806
    %808 = vdwg.mxu0
    %809 = vmatprep.subr.bf16.mxu0 %v577
    %810 = vmatpush1.bf16.msra.mxu0 %v576
    %811 = vmatprep.subr.bf16.mxu0 0
    %812 = vmatpush1.bf16.msra.mxu0 0
    %813 = vmatprep.subr.bf16.mxu0 0
    %814 = vmatpush1.bf16.msra.mxu0 0
    %815 = vmatprep.subr.bf16.mxu0 0
    %816 = vmatpush1.bf16.msra.mxu0 0
    %817 = vmatprep.subr.bf16.mxu0 0
    %818 = vmatpush1.bf16.msra.mxu0 0
    %819 = vmatprep.subr.bf16.mxu0 0
    %820 = vmatpush1.bf16.msra.mxu0 0
    %821 = vmatprep.subr.bf16.mxu0 0
    %822 = vmatpush1.bf16.msra.mxu0 0
    %823 = vmatprep.subr.bf16.mxu0 0
    %824 = vmatpush1.bf16.msra.mxu0 0
    %825 = vmatprep.subr.bf16.mxu0 0
    %826 = vmatpush1.bf16.msra.mxu0 0
    %827 = vmatprep.subr.bf16.mxu0 0
    %828 = vmatpush1.bf16.msra.mxu0 0
    %829 = vmatprep.subr.bf16.mxu0 0
    %830 = vmatpush1.bf16.msra.mxu0 0
    %831 = vmatprep.subr.bf16.mxu0 0
    %832 = vmatpush1.bf16.msra.mxu0 0
    %833 = vmatprep.subr.bf16.mxu0 0
    %834 = vmatpush1.bf16.msra.mxu0 0
    %835 = vmatprep.subr.bf16.mxu0 0
    %836 = vmatpush1.bf16.msra.mxu0 0
    %837 = vmatprep.subr.bf16.mxu0 0
    %838 = vmatpush1.bf16.msra.mxu0 0
    %839 = vmatprep.subr.bf16.mxu0 0
    %840 = vmatpush1.bf16.msra.mxu0 0
    %841 = vmatprep.mubr.bf16.mxu0 0
    %842 = vmatmul.mubr.bf16.gmra.mrb[0].mxu0 %v678
    %v843 = vpop.f32.mrb[0].mxu0
    %v844 = vadd.f32 %v801, %v843
    %v845 = vpop.f32.mrb[0].mxu0
    %v846 = vadd.f32 %v803, %v845
    %v847 = vpop.f32.mrb[0].mxu0
    %v848 = vadd.f32 %v805, %v847
    %v849 = vpop.f32.mrb[0].mxu0
    %v850 = vadd.f32 %v807, %v849
    %851 = vdwg.mxu0
    %v852 = vmax.f32 %v844, 0.0
    %v853 = vmax.f32 %v846, 0.0
    %v854 = vmax.f32 %v848, 0.0
    %v855 = vmax.f32 %v850, 0.0
    %v856 = vpack.c.bf16 %v854, %v852
    %v857 = vpack.c.bf16 %v855, %v853
    %v858 = vld [vmem:[#allocation4] sm:$0xff]
    %v859 = vld [vmem:[#allocation4 + $0x8] sm:$0xff]
    %v860 = vld [vmem:[#allocation4 + $0x10] sm:$0xff]
    %v861 = vld [vmem:[#allocation4 + $0x18] sm:$0xff]
    %v862 = vld [vmem:[#allocation4 + $0x20] sm:$0xff]
    %v863 = vld [vmem:[#allocation4 + $0x28] sm:$0xff]
    %v864 = vld [vmem:[#allocation4 + $0x30] sm:$0xff]
    %v865 = vld [vmem:[#allocation4 + $0x38] sm:$0xff]
    %v866 = vld [vmem:[#allocation4 + $0x40] sm:$0xff]
    %v867 = vld [vmem:[#allocation4 + $0x48] sm:$0xff]
    %v868 = vld [vmem:[#allocation4 + $0x50] sm:$0xff]
    %v869 = vld [vmem:[#allocation4 + $0x58] sm:$0xff]
    %v870 = vld [vmem:[#allocation4 + $0x60] sm:$0xff]
    %v871 = vld [vmem:[#allocation4 + $0x68] sm:$0xff]
    %v872 = vld [vmem:[#allocation4 + $0x70] sm:$0xff]
    %v873 = vld [vmem:[#allocation4 + $0x78] sm:$0xff]
    %v874 = vld [vmem:[#allocation4 + $0x80] sm:$0xff]
    %v875 = vld [vmem:[#allocation4 + $0x88] sm:$0xff]
    %v876 = vld [vmem:[#allocation4 + $0x90] sm:$0xff]
    %v877 = vld [vmem:[#allocation4 + $0x98] sm:$0xff]
    %v878 = vld [vmem:[#allocation4 + $0xa0] sm:$0xff]
    %v879 = vld [vmem:[#allocation4 + $0xa8] sm:$0xff]
    %v880 = vld [vmem:[#allocation4 + $0xb0] sm:$0xff]
    %v881 = vld [vmem:[#allocation4 + $0xb8] sm:$0xff]
    %v882 = vld [vmem:[#allocation4 + $0xc0] sm:$0xff]
    %v883 = vld [vmem:[#allocation4 + $0xc8] sm:$0xff]
    %v884 = vld [vmem:[#allocation4 + $0xd0] sm:$0xff]
    %v885 = vld [vmem:[#allocation4 + $0xd8] sm:$0xff]
    %v886 = vld [vmem:[#allocation4 + $0xe0] sm:$0xff]
    %v887 = vld [vmem:[#allocation4 + $0xe8] sm:$0xff]
    %v888 = vld [vmem:[#allocation4 + $0xf0] sm:$0xff]
    %v889 = vld [vmem:[#allocation4 + $0xf8] sm:$0xff]
    %v890 = vld [vmem:[%s4] sm:$0x3]
    %v892 = vlaneseq
    %v893 = vshrl.u32 %v892, 7
    %v894 = vsub.s32 0, %v893
    %v895 = vrot.slane %v890, %v894
    %v896 = vlaneseq
    %v897 = vshrl.u32 %v896, 7
    %v898 = vsub.s32 1, %v897
    %v899 = vrot.slane %v890, %v898
    %v934 = vunpack.c.l.b16 %v858
    %v935 = vunpack.c.h.b16 %v858
    %v936 = vunpack.c.l.b16 %v859
    %v937 = vunpack.c.h.b16 %v859
    %v938 = vunpack.c.l.b16 %v860
    %v939 = vunpack.c.h.b16 %v860
    %v940 = vunpack.c.l.b16 %v861
    %v941 = vunpack.c.h.b16 %v861
    %v942 = vunpack.c.l.b16 %v862
    %v943 = vunpack.c.h.b16 %v862
    %v944 = vunpack.c.l.b16 %v863
    %v945 = vunpack.c.h.b16 %v863
    %v946 = vunpack.c.l.b16 %v864
    %v947 = vunpack.c.h.b16 %v864
    %v948 = vunpack.c.l.b16 %v865
    %v949 = vunpack.c.h.b16 %v865
    %v950 = vunpack.c.l.b16 %v866
    %v951 = vunpack.c.h.b16 %v866
    %v952 = vunpack.c.l.b16 %v867
    %v953 = vunpack.c.h.b16 %v867
    %v954 = vunpack.c.l.b16 %v868
    %v955 = vunpack.c.h.b16 %v868
    %v956 = vunpack.c.l.b16 %v869
    %v957 = vunpack.c.h.b16 %v869
    %v958 = vunpack.c.l.b16 %v870
    %v959 = vunpack.c.h.b16 %v870
    %v960 = vunpack.c.l.b16 %v871
    %v961 = vunpack.c.h.b16 %v871
    %v962 = vunpack.c.l.b16 %v872
    %v963 = vunpack.c.h.b16 %v872
    %v964 = vunpack.c.l.b16 %v873
    %v965 = vunpack.c.h.b16 %v873
    %v966 = vunpack.c.l.b16 %v874
    %v967 = vunpack.c.h.b16 %v874
    %v968 = vunpack.c.l.b16 %v875
    %v969 = vunpack.c.h.b16 %v875
    %v970 = vunpack.c.l.b16 %v876
    %v971 = vunpack.c.h.b16 %v876
    %v972 = vunpack.c.l.b16 %v877
    %v973 = vunpack.c.h.b16 %v877
    %v974 = vunpack.c.l.b16 %v878
    %v975 = vunpack.c.h.b16 %v878
    %v976 = vunpack.c.l.b16 %v879
    %v977 = vunpack.c.h.b16 %v879
    %v978 = vunpack.c.l.b16 %v880
    %v979 = vunpack.c.h.b16 %v880
    %v980 = vunpack.c.l.b16 %v881
    %v981 = vunpack.c.h.b16 %v881
    %v982 = vunpack.c.l.b16 %v882
    %v983 = vunpack.c.h.b16 %v882
    %v984 = vunpack.c.l.b16 %v883
    %v985 = vunpack.c.h.b16 %v883
    %v986 = vunpack.c.l.b16 %v884
    %v987 = vunpack.c.h.b16 %v884
    %v988 = vunpack.c.l.b16 %v885
    %v989 = vunpack.c.h.b16 %v885
    %v990 = vunpack.c.l.b16 %v886
    %v991 = vunpack.c.h.b16 %v886
    %v992 = vunpack.c.l.b16 %v887
    %v993 = vunpack.c.h.b16 %v887
    %v994 = vunpack.c.l.b16 %v888
    %v995 = vunpack.c.h.b16 %v888
    %v996 = vunpack.c.l.b16 %v889
    %v997 = vunpack.c.h.b16 %v889
    %v998 = vpack.c.b16 %v936, %v934
    %v999 = vpack.c.b16 %v937, %v935
    %v1000 = vpack.c.b16 %v940, %v938
    %v1001 = vpack.c.b16 %v941, %v939
    %v1002 = vpack.c.b16 %v944, %v942
    %v1003 = vpack.c.b16 %v945, %v943
    %v1004 = vpack.c.b16 %v948, %v946
    %v1005 = vpack.c.b16 %v949, %v947
    %v1006 = vpack.c.b16 %v952, %v950
    %v1007 = vpack.c.b16 %v953, %v951
    %v1008 = vpack.c.b16 %v956, %v954
    %v1009 = vpack.c.b16 %v957, %v955
    %v1010 = vpack.c.b16 %v960, %v958
    %v1011 = vpack.c.b16 %v961, %v959
    %v1012 = vpack.c.b16 %v964, %v962
    %v1013 = vpack.c.b16 %v965, %v963
    %v1014 = vpack.c.b16 %v968, %v966
    %v1015 = vpack.c.b16 %v969, %v967
    %v1016 = vpack.c.b16 %v972, %v970
    %v1017 = vpack.c.b16 %v973, %v971
    %v1018 = vpack.c.b16 %v976, %v974
    %v1019 = vpack.c.b16 %v977, %v975
    %v1020 = vpack.c.b16 %v980, %v978
    %v1021 = vpack.c.b16 %v981, %v979
    %v1022 = vpack.c.b16 %v984, %v982
    %v1023 = vpack.c.b16 %v985, %v983
    %v1024 = vpack.c.b16 %v988, %v986
    %v1025 = vpack.c.b16 %v989, %v987
    %v1026 = vpack.c.b16 %v992, %v990
    %v1027 = vpack.c.b16 %v993, %v991
    %v1028 = vpack.c.b16 %v996, %v994
    %v1029 = vpack.c.b16 %v997, %v995
    %1062 = vmatprep.subr.bf16.mxu0 %v999
    %1063 = vmatpush1.bf16.msra.mxu0 %v998
    %1064 = vmatprep.subr.bf16.mxu0 %v1001
    %1065 = vmatpush1.bf16.msra.mxu0 %v1000
    %1066 = vmatprep.subr.bf16.mxu0 %v1003
    %1067 = vmatpush1.bf16.msra.mxu0 %v1002
    %1068 = vmatprep.subr.bf16.mxu0 %v1005
    %1069 = vmatpush1.bf16.msra.mxu0 %v1004
    %1070 = vmatprep.subr.bf16.mxu0 %v1007
    %1071 = vmatpush1.bf16.msra.mxu0 %v1006
    %1072 = vmatprep.subr.bf16.mxu0 %v1009
    %1073 = vmatpush1.bf16.msra.mxu0 %v1008
    %1074 = vmatprep.subr.bf16.mxu0 %v1011
    %1075 = vmatpush1.bf16.msra.mxu0 %v1010
    %1076 = vmatprep.subr.bf16.mxu0 %v1013
    %1077 = vmatpush1.bf16.msra.mxu0 %v1012
    %1078 = vmatprep.subr.bf16.mxu0 %v1015
    %1079 = vmatpush1.bf16.msra.mxu0 %v1014
    %1080 = vmatprep.subr.bf16.mxu0 %v1017
    %1081 = vmatpush1.bf16.msra.mxu0 %v1016
    %1082 = vmatprep.subr.bf16.mxu0 %v1019
    %1083 = vmatpush1.bf16.msra.mxu0 %v1018
    %1084 = vmatprep.subr.bf16.mxu0 %v1021
    %1085 = vmatpush1.bf16.msra.mxu0 %v1020
    %1086 = vmatprep.subr.bf16.mxu0 %v1023
    %1087 = vmatpush1.bf16.msra.mxu0 %v1022
    %1088 = vmatprep.subr.bf16.mxu0 %v1025
    %1089 = vmatpush1.bf16.msra.mxu0 %v1024
    %1090 = vmatprep.subr.bf16.mxu0 %v1027
    %1091 = vmatpush1.bf16.msra.mxu0 %v1026
    %1092 = vmatprep.subr.bf16.mxu0 %v1029
    %1093 = vmatpush1.bf16.msra.mxu0 %v1028
    %1094 = vmatprep.mubr.bf16.mxu0 %v857
    %1095 = vmatmul.mubr.bf16.gmra.mrb[0].mxu0 %v856
    %v1096 = vpop.f32.mrb[0].mxu0
    %v1097 = vadd.f32 %v895, %v1096
    %v1098 = vpop.f32.mrb[0].mxu0
    %v1099 = vadd.f32 %v899, %v1098
    %v1100 = vpop.f32.mrb[0].mxu0
    %v1101 = vadd.f32 %v895, %v1100
    %v1102 = vpop.f32.mrb[0].mxu0
    %v1103 = vadd.f32 %v899, %v1102
    %1104 = vdwg.mxu0
    %v1105 = vmax.f32 %v1097, 0.0
    %v1106 = vmax.f32 %v1099, 0.0
    %v1107 = vmax.f32 %v1101, 0.0
    %v1108 = vmax.f32 %v1103, 0.0
    %v1109 = vpack.c.bf16 %v1107, %v1105
    %v1110 = vpack.c.bf16 %v1108, %v1106
    %v1111 = vld [vmem:[%s5] sm:$0xf]
    %v1112 = vld [vmem:[%s5 + $0x4] sm:$0xf]
    %v1113 = vld [vmem:[%s5 + $0x8] sm:$0xf]
    %v1114 = vld [vmem:[%s5 + $0xc] sm:$0xf]
    %v1115 = vld [vmem:[%s5 + $0x10] sm:$0xf]
    %v1116 = vld [vmem:[%s5 + $0x14] sm:$0xf]
    %v1117 = vld [vmem:[%s5 + $0x18] sm:$0xf]
    %v1118 = vld [vmem:[%s5 + $0x1c] sm:$0xf]
    %v1119 = vld [vmem:[%s5 + $0x20] sm:$0xf]
    %v1120 = vld [vmem:[%s5 + $0x24] sm:$0xf]
    %v1121 = vld [vmem:[%s5 + $0x28] sm:$0xf]
    %v1122 = vld [vmem:[%s5 + $0x2c] sm:$0xf]
    %v1123 = vld [vmem:[%s5 + $0x30] sm:$0xf]
    %v1124 = vld [vmem:[%s5 + $0x34] sm:$0xf]
    %v1125 = vld [vmem:[%s5 + $0x38] sm:$0xf]
    %v1126 = vld [vmem:[%s5 + $0x3c] sm:$0xf]
    %v1127 = vld [vmem:[%s5 + $0x40] sm:$0xf]
    %v1128 = vld [vmem:[%s5 + $0x44] sm:$0xf]
    %v1129 = vld [vmem:[%s5 + $0x48] sm:$0xf]
    %v1130 = vld [vmem:[%s5 + $0x4c] sm:$0xf]
    %v1131 = vld [vmem:[%s5 + $0x50] sm:$0xf]
    %v1132 = vld [vmem:[%s5 + $0x54] sm:$0xf]
    %v1133 = vld [vmem:[%s5 + $0x58] sm:$0xf]
    %v1134 = vld [vmem:[%s5 + $0x5c] sm:$0xf]
    %v1135 = vld [vmem:[%s5 + $0x60] sm:$0xf]
    %v1136 = vld [vmem:[%s5 + $0x64] sm:$0xf]
    %v1137 = vld [vmem:[%s5 + $0x68] sm:$0xf]
    %v1138 = vld [vmem:[%s5 + $0x6c] sm:$0xf]
    %v1139 = vld [vmem:[%s5 + $0x70] sm:$0xf]
    %v1140 = vld [vmem:[%s5 + $0x74] sm:$0xf]
    %v1141 = vld [vmem:[%s5 + $0x78] sm:$0xf]
    %v1142 = vld [vmem:[%s5 + $0x7c] sm:$0xf]
    %v1143 = vld [vmem:[%s6] sm:$0x1]
    %v1145 = vlaneseq
    %v1146 = vshrl.u32 %v1145, 7
    %v1147 = vsub.s32 0, %v1146
    %v1148 = vrot.slane %v1143, %v1147
    %v1182 = vunpack.c.l.b16 %v1111
    %v1183 = vunpack.c.l.b16 %v1112
    %v1184 = vunpack.c.l.b16 %v1113
    %v1185 = vunpack.c.l.b16 %v1114
    %v1186 = vunpack.c.l.b16 %v1115
    %v1187 = vunpack.c.l.b16 %v1116
    %v1188 = vunpack.c.l.b16 %v1117
    %v1189 = vunpack.c.l.b16 %v1118
    %v1190 = vunpack.c.l.b16 %v1119
    %v1191 = vunpack.c.l.b16 %v1120
    %v1192 = vunpack.c.l.b16 %v1121
    %v1193 = vunpack.c.l.b16 %v1122
    %v1194 = vunpack.c.l.b16 %v1123
    %v1195 = vunpack.c.l.b16 %v1124
    %v1196 = vunpack.c.l.b16 %v1125
    %v1197 = vunpack.c.l.b16 %v1126
    %v1198 = vunpack.c.l.b16 %v1127
    %v1199 = vunpack.c.l.b16 %v1128
    %v1200 = vunpack.c.l.b16 %v1129
    %v1201 = vunpack.c.l.b16 %v1130
    %v1202 = vunpack.c.l.b16 %v1131
    %v1203 = vunpack.c.l.b16 %v1132
    %v1204 = vunpack.c.l.b16 %v1133
    %v1205 = vunpack.c.l.b16 %v1134
    %v1206 = vunpack.c.l.b16 %v1135
    %v1207 = vunpack.c.l.b16 %v1136
    %v1208 = vunpack.c.l.b16 %v1137
    %v1209 = vunpack.c.l.b16 %v1138
    %v1210 = vunpack.c.l.b16 %v1139
    %v1211 = vunpack.c.l.b16 %v1140
    %v1212 = vunpack.c.l.b16 %v1141
    %v1213 = vunpack.c.l.b16 %v1142
    %v1214 = vpack.c.b16 %v1183, %v1182
    %v1215 = vpack.c.b16 %v1185, %v1184
    %v1216 = vpack.c.b16 %v1187, %v1186
    %v1217 = vpack.c.b16 %v1189, %v1188
    %v1218 = vpack.c.b16 %v1191, %v1190
    %v1219 = vpack.c.b16 %v1193, %v1192
    %v1220 = vpack.c.b16 %v1195, %v1194
    %v1221 = vpack.c.b16 %v1197, %v1196
    %v1222 = vpack.c.b16 %v1199, %v1198
    %v1223 = vpack.c.b16 %v1201, %v1200
    %v1224 = vpack.c.b16 %v1203, %v1202
    %v1225 = vpack.c.b16 %v1205, %v1204
    %v1226 = vpack.c.b16 %v1207, %v1206
    %v1227 = vpack.c.b16 %v1209, %v1208
    %v1228 = vpack.c.b16 %v1211, %v1210
    %v1229 = vpack.c.b16 %v1213, %v1212
    %1246 = vmatprep.subr.bf16.mxu0 0
    %1247 = vmatpush1.bf16.msra.mxu0 %v1214
    %1248 = vmatprep.subr.bf16.mxu0 0
    %1249 = vmatpush1.bf16.msra.mxu0 %v1215
    %1250 = vmatprep.subr.bf16.mxu0 0
    %1251 = vmatpush1.bf16.msra.mxu0 %v1216
    %1252 = vmatprep.subr.bf16.mxu0 0
    %1253 = vmatpush1.bf16.msra.mxu0 %v1217
    %1254 = vmatprep.subr.bf16.mxu0 0
    %1255 = vmatpush1.bf16.msra.mxu0 %v1218
    %1256 = vmatprep.subr.bf16.mxu0 0
    %1257 = vmatpush1.bf16.msra.mxu0 %v1219
    %1258 = vmatprep.subr.bf16.mxu0 0
    %1259 = vmatpush1.bf16.msra.mxu0 %v1220
    %1260 = vmatprep.subr.bf16.mxu0 0
    %1261 = vmatpush1.bf16.msra.mxu0 %v1221
    %1262 = vmatprep.subr.bf16.mxu0 0
    %1263 = vmatpush1.bf16.msra.mxu0 %v1222
    %1264 = vmatprep.subr.bf16.mxu0 0
    %1265 = vmatpush1.bf16.msra.mxu0 %v1223
    %1266 = vmatprep.subr.bf16.mxu0 0
    %1267 = vmatpush1.bf16.msra.mxu0 %v1224
    %1268 = vmatprep.subr.bf16.mxu0 0
    %1269 = vmatpush1.bf16.msra.mxu0 %v1225
    %1270 = vmatprep.subr.bf16.mxu0 0
    %1271 = vmatpush1.bf16.msra.mxu0 %v1226
    %1272 = vmatprep.subr.bf16.mxu0 0
    %1273 = vmatpush1.bf16.msra.mxu0 %v1227
    %1274 = vmatprep.subr.bf16.mxu0 0
    %1275 = vmatpush1.bf16.msra.mxu0 %v1228
    %1276 = vmatprep.subr.bf16.mxu0 0
    %1277 = vmatpush1.bf16.msra.mxu0 %v1229
    %1278 = vmatprep.mubr.bf16.mxu0 %v1110
    %1279 = vmatmul.mubr.bf16.gmra.mrb[0].mxu0 %v1109
    %v1280 = vpop.f32.mrb[0].mxu0
    %v1281 = vadd.f32 %v1148, %v1280
    %v1282 = vpop.f32.mrb[0].mxu0
    %v1283 = vpop.f32.mrb[0].mxu0
    %v1284 = vadd.f32 %v1148, %v1283
    %v1285 = vpop.f32.mrb[0].mxu0
    %1286 = vdwg.mxu0
    %1287 = vst [vmem:[%s7] sm:$0xff] %v1281
    %1288 = vst [vmem:[%s7 + $0x8] sm:$0xff] %v1284
    // Predicated region
    $region38: #{encoder_forward.1} parent=1 // pred_check
      _
    $region39: #{encoder_forward.1} parent=1 // pred_check_branch
      %1290 = sbr.rel (0) target = $region41
    $region40: #{encoder_forward.1} parent=1 // pred_region
      _
    $region41: #{encoder_forward.1} parent=1 // pred_fallthru
      _
    // Predicated region
    $region42: #{encoder_forward.1} parent=1 // pred_check
      _
    $region43: #{encoder_forward.1} parent=1 // pred_check_branch
      %1292 = sbr.rel (0) target = $region45
    $region44: #{encoder_forward.1} parent=1 // pred_region
      _
    $region45: #{encoder_forward.1} parent=1 // pred_fallthru
      _
    %1293 = vsyncpa [#allocation3], 1
    %1294 = vsyncpa [#allocation5], 1

</llo_original>
